<compile_context>
chip_gen: v7x
topology: tpu7x:2x2x1
jax: 0.10.0
libtpu: 0.0.40
codegen_flags: <defaults>
</compile_context>

<pallas_src>
import functools

import jax
import jax.numpy as jnp
from jax import lax
from jax.experimental import pallas as pl
from jax.experimental.pallas import tpu as pltpu

_EPS = 1e-5
_LANE = 128
_SUBLANE = 8


def _round_up(n, m):
    return ((n + m - 1) // m) * m


def _vmem_limit(bytes_needed):
    # Generous headroom over the per-tile footprint, clamped so it stays within every
    # generation's physical VMEM (v7x: 64 MiB per TensorCore, 32 MiB scoped default).
    return int(min(max(4 * bytes_needed + (2 << 20), 16 << 20), 48 << 20))


# --------------------------------------------------------------------------- kernels ----
def _colstats_kernel(x_ref, s_ref):
    """Accumulate per-channel sum / sum-of-squares over row tiles in a single read of x."""
    i = pl.program_id(0)

    @pl.when(i == 0)
    def _():
        s_ref[...] = jnp.zeros_like(s_ref)

    x = x_ref[...].astype(jnp.float32)
    s_ref[0:1, :] += jnp.sum(x, axis=0, keepdims=True)
    s_ref[1:2, :] += jnp.sum(x * x, axis=0, keepdims=True)


def _conv_stats_kernel(x_ref, sc1_ref, sh1_ref, w_ref, bdw_ref, y_ref, s2_ref, *, K, dil):
    """Per-batch: fused BN1-apply -> dilated depthwise conv (shifted in-register taps with
    zero edge fill, no padded scratch) -> residual add; also accumulates BN2 (sum, sum_sq)."""
    b = pl.program_id(0)

    @pl.when(b == 0)
    def _():
        s2_ref[...] = jnp.zeros_like(s2_ref)

    x = x_ref[0].astype(jnp.float32)                  # (L, C_pad)
    L, C = x.shape
    xn = x * sc1_ref[...] + sh1_ref[...]              # BN1 folded into one FMA

    pad = (K // 2) * dil
    w = w_ref[...]                                    # (K, C_pad)
    y = x + bdw_ref[...]                              # residual + conv bias
    for k in range(K):                                # K is small & static -> unrolled taps
        off = k * dil - pad
        if off == 0:
            tap = xn
        elif off > 0:
            tap = jnp.concatenate(
                [xn[off:, :], jnp.zeros((off, C), jnp.float32)], axis=0)
        else:
            tap = jnp.concatenate(
                [jnp.zeros((-off, C), jnp.float32), xn[:off, :]], axis=0)
        y = y + tap * w[k:k + 1, :]

    y_ref[0] = y.astype(y_ref.dtype)
    s2_ref[0:1, :] += jnp.sum(y, axis=0, keepdims=True)
    s2_ref[1:2, :] += jnp.sum(y * y, axis=0, keepdims=True)


def _mlp_kernel(y_ref, sc2_ref, sh2_ref, w1_ref, b1_ref, w2_ref, b2_ref, o_ref, *, mxu_dtype):
    """Per row-tile: fused BN2-apply -> fc1 -> ReLU -> fc2 (final x2 pre-folded into w2/b2)."""
    y = y_ref[...].astype(jnp.float32)
    yn = y * sc2_ref[...] + sh2_ref[...]
    h = jnp.dot(yn.astype(mxu_dtype), w1_ref[...],
                preferred_element_type=jnp.float32) + b1_ref[...]
    h = jnp.maximum(h, 0.0)
    z = jnp.dot(h.astype(mxu_dtype), w2_ref[...],
                preferred_element_type=jnp.float32) + b2_ref[...]
    o_ref[...] = z.astype(o_ref.dtype)


# --------------------------------------------------------------------------- wrapper ----
def metaformer_block(x, params, *, kernel_size, dilation, row_tile=512,
                     mxu_dtype=jnp.float32):
    """x: (B, L, C) float32.  Returns (B, L, C)."""
    B, L, C = x.shape
    K = kernel_size
    H = params["fc1_w"].shape[0]
    R = B * L
    f32 = jnp.float32

    # Lane-dense padding of channel / hidden dims; sublane-aligned row tile.
    C_pad = _round_up(C, _LANE)
    H_pad = _round_up(H, _LANE)
    TM = min(_round_up(row_tile, _SUBLANE), _round_up(R, _SUBLANE))
    R_pad = _round_up(R, TM)
    itemsize_w = jnp.dtype(mxu_dtype).itemsize

    def padc(v, n):                                   # 1-D channel vector -> (1, n), zero padded
        return jnp.pad(v.astype(f32), (0, n - v.shape[0])).reshape(1, n)

    g1 = padc(params["bn1_gamma"], C_pad)
    b1 = padc(params["bn1_beta"], C_pad)
    g2 = padc(params["bn2_gamma"], C_pad)
    b2 = padc(params["bn2_beta"], C_pad)
    bdw = padc(params["dw_bias"], C_pad)
    wdw = jnp.pad(jnp.transpose(params["dw_weight"].reshape(C, K), (1, 0)),
                  ((0, 0), (0, C_pad - C))).astype(f32)                      # (K, C_pad)
    w1 = jnp.pad(jnp.transpose(params["fc1_w"], (1, 0)),
                 ((0, C_pad - C), (0, H_pad - H))).astype(mxu_dtype)         # (C_pad, H_pad)
    fb1 = padc(params["fc1_b"], H_pad)
    # Fold the final `out + out` (== 2 * out; double permute is the identity) into fc2.
    w2 = jnp.pad(jnp.transpose(params["fc2_w"], (1, 0)) * 2.0,
                 ((0, H_pad - H), (0, C_pad - C))).astype(mxu_dtype)         # (H_pad, C_pad)
    fb2 = padc(params["fc2_b"] * 2.0, C_pad)

    x_p = jnp.pad(x.astype(f32), ((0, 0), (0, 0), (0, C_pad - C)))           # (B, L, C_pad)
    x2d = jnp.pad(x_p.reshape(R, C_pad), ((0, R_pad - R), (0, 0)))           # zero rows keep sums exact

    vec_spec = pl.BlockSpec((1, C_pad), lambda i: (0, 0))

    # ---- pass 1: BN1 batch statistics (fused sum / sum_sq, single read of x) ----
    stats1 = pl.pallas_call(
        _colstats_kernel,
        out_shape=jax.ShapeDtypeStruct((2, C_pad), f32),
        grid=(R_pad // TM,),
        in_specs=[pl.BlockSpec((TM, C_pad), lambda i: (i, 0))],
        out_specs=pl.BlockSpec((2, C_pad), lambda i: (0, 0)),
        compiler_params=pltpu.CompilerParams(
            dimension_semantics=("arbitrary",),
            vmem_limit_bytes=_vmem_limit(2 * TM * C_pad * 4 + 2 * C_pad * 4)),
    )(x2d)

    n = jnp.float32(R)
    mean1 = stats1[0] / n
    var1 = jnp.maximum(stats1[1] / n - mean1 * mean1, 0.0)
    scale1 = (g1[0] * lax.rsqrt(var1 + _EPS)).reshape(1, C_pad)
    shift1 = (b1[0] - mean1 * scale1[0]).reshape(1, C_pad)

    # ---- pass 2: BN1-apply + dilated depthwise conv + residual; fused BN2 stats ----
    conv_kern = functools.partial(_conv_stats_kernel, K=K, dil=dilation)
    y, stats2 = pl.pallas_call(
        conv_kern,
        out_shape=(jax.ShapeDtypeStruct((B, L, C_pad), f32),
                   jax.ShapeDtypeStruct((2, C_pad), f32)),
        grid=(B,),
        in_specs=[pl.BlockSpec((1, L, C_pad), lambda i: (i, 0, 0)),
                  vec_spec, vec_spec,
                  pl.BlockSpec((K, C_pad), lambda i: (0, 0)),
                  vec_spec],
        out_specs=(pl.BlockSpec((1, L, C_pad), lambda i: (i, 0, 0)),
                   pl.BlockSpec((2, C_pad), lambda i: (0, 0))),
        compiler_params=pltpu.CompilerParams(
            dimension_semantics=("arbitrary",),
            vmem_limit_bytes=_vmem_limit(4 * L * C_pad * 4 + (K + 6) * C_pad * 4)),
    )(x_p, scale1, shift1, wdw, bdw)

    mean2 = stats2[0] / n
    var2 = jnp.maximum(stats2[1] / n - mean2 * mean2, 0.0)
    scale2 = (g2[0] * lax.rsqrt(var2 + _EPS)).reshape(1, C_pad)
    shift2 = (b2[0] - mean2 * scale2[0]).reshape(1, C_pad)

    # ---- pass 3: row-tiled fused BN2-apply + MLP (fc1 -> ReLU -> fc2, x2 folded) ----
    y2d = y.reshape(R, C_pad)
    mlp_kern = functools.partial(_mlp_kernel, mxu_dtype=mxu_dtype)
    cost3 = pl.CostEstimate(
        flops=int(4 * R * C_pad * H_pad),
        transcendentals=0,
        bytes_accessed=int(4 * 2 * R * C_pad + itemsize_w * 2 * C_pad * H_pad
                           + 4 * (3 * C_pad + H_pad)))
    z2d = pl.pallas_call(
        mlp_kern,
        out_shape=jax.ShapeDtypeStruct((R, C_pad), x.dtype),
        grid=(pl.cdiv(R, TM),),
        in_specs=[pl.BlockSpec((TM, C_pad), lambda i: (i, 0)),
                  vec_spec, vec_spec,
                  pl.BlockSpec((C_pad, H_pad), lambda i: (0, 0)),
                  pl.BlockSpec((1, H_pad), lambda i: (0, 0)),
                  pl.BlockSpec((H_pad, C_pad), lambda i: (0, 0)),
                  vec_spec],
        out_specs=pl.BlockSpec((TM, C_pad), lambda i: (i, 0)),
        compiler_params=pltpu.CompilerParams(
            dimension_semantics=("parallel",),
            vmem_limit_bytes=_vmem_limit(4 * TM * C_pad * 4 + TM * H_pad * 4
                                         + 2 * C_pad * H_pad * itemsize_w
                                         + (2 * C_pad + H_pad) * 4)),
        cost_estimate=cost3,
    )(y2d, scale2, shift2, w1, fb1, w2, fb2)

    return z2d[:, :C].reshape(B, L, C)


# ------------------------------------------------------------------------- reference ----
def reference(x, params, *, kernel_size, dilation):
    """Pure-JAX reference mirroring the PyTorch forward (training-mode BN)."""
    C = x.shape[-1]
    xc = jnp.transpose(x, (0, 2, 1))                  # (B, C, L) like torch after permute

    def bn(v, g, b):
        m = jnp.mean(v, axis=(0, 2), keepdims=True)
        s = jnp.mean(jnp.square(v - m), axis=(0, 2), keepdims=True)
        return (v - m) / jnp.sqrt(s + _EPS) * g[None, :, None] + b[None, :, None]

    residual = xc
    out = bn(xc, params["bn1_gamma"], params["bn1_beta"])
    pad = (kernel_size // 2) * dilation
    out = lax.conv_general_dilated(
        out, params["dw_weight"], window_strides=(1,), padding=[(pad, pad)],
        rhs_dilation=(dilation,), dimension_numbers=("NCH", "OIH", "NCH"),
        feature_group_count=C) + params["dw_bias"][None, :, None]
    out = residual + out
    out = bn(out, params["bn2_gamma"], params["bn2_beta"])
    out = jnp.transpose(out, (0, 2, 1))               # (B, L, C)
    h = jax.nn.relu(out @ params["fc1_w"].T + params["fc1_b"])
    z = h @ params["fc2_w"].T + params["fc2_b"]
    return z + z                                      # out + out.permute().permute()


if __name__ == "__main__":
    B, L, C = 2, 16, 8          # batch, seq_len, model_dim
    K, DIL = 3, 2               # kernel_size, dilation_rate
    H = 4 * C

    key = jax.random.PRNGKey(0)
    ks = jax.random.split(key, 11)
    params = {
        "bn1_gamma": 1.0 + 0.1 * jax.random.normal(ks[0], (C,), jnp.float32),
        "bn1_beta": 0.1 * jax.random.normal(ks[1], (C,), jnp.float32),
        "dw_weight": 0.3 * jax.random.normal(ks[2], (C, 1, K), jnp.float32),  # (C_out, 1, K)
        "dw_bias": 0.1 * jax.random.normal(ks[3], (C,), jnp.float32),
        "bn2_gamma": 1.0 + 0.1 * jax.random.normal(ks[4], (C,), jnp.float32),
        "bn2_beta": 0.1 * jax.random.normal(ks[5], (C,), jnp.float32),
        "fc1_w": 0.2 * jax.random.normal(ks[6], (H, C), jnp.float32),
        "fc1_b": 0.1 * jax.random.normal(ks[7], (H,), jnp.float32),
        "fc2_w": 0.2 * jax.random.normal(ks[8], (C, H), jnp.float32),
        "fc2_b": 0.1 * jax.random.normal(ks[9], (C,), jnp.float32),
    }
    x = jax.random.normal(ks[10], (B, L, C), jnp.float32)

    # f32 MXU path: bit-faithful to the PyTorch module semantics.
    out = metaformer_block(x, params, kernel_size=K, dilation=DIL)
    out = jax.block_until_ready(out)

    ref = reference(x, params, kernel_size=K, dilation=DIL)
    assert out.shape == (B, L, C), out.shape
    max_err = float(jnp.max(jnp.abs(out - ref)))
    assert jnp.allclose(out, ref, atol=1e-4, rtol=1e-4), max_err

    # bf16 MXU fast path (v6e/v7x); loose sanity check only (bf16 rounding).
    out_bf16 = metaformer_block(x, params, kernel_size=K, dilation=DIL,
                                mxu_dtype=jnp.bfloat16)
    out_bf16 = jax.block_until_ready(out_bf16)
    assert bool(jnp.all(jnp.isfinite(out_bf16)))
    assert float(jnp.max(jnp.abs(out_bf16 - ref))) < 0.5

    print("KERNEL_OK")
</pallas_src>

<mosaic_0001>
module attributes {stable_mosaic.version = 11 : i64} {
  func.func @_colstats_kernel(%arg0: i32, %arg1: memref<32x128xf32, #tpu.memory_space<vmem>>, %arg2: memref<2x128xf32, #tpu.memory_space<vmem>>) attributes {dimension_semantics = [#tpu.dimension_semantics<arbitrary>], iteration_bounds = array<i64: 1>, scalar_prefetch = 0 : i64, scratch_operands = 0 : i64, tpu.core_type = #tpu.core_type<tc>, window_params = [{transform_indices = @transform_0, window_bounds = array<i64: 32, 128>}, {pipeline_mode = #tpu.pipeline_mode<synchronous>, transform_indices = @transform_1, window_bounds = array<i64: 2, 128>}]} {
    %c0_i32 = arith.constant 0 : i32
    %0 = arith.cmpi eq, %arg0, %c0_i32 : i32
    %1 = arith.extui %0 : i1 to i32
    %c0_i32_0 = arith.constant 0 : i32
    %2 = arith.cmpi ne, %1, %c0_i32_0 : i32
    scf.if %2 {
      %cst_10 = arith.constant 0.000000e+00 : f32
      %15 = vector.broadcast %cst_10 : f32 to vector<2x128xf32>
      %c0_11 = arith.constant 0 : index
      %c0_12 = arith.constant 0 : index
      %16 = vector.load %arg2[%c0_11, %c0_12] : memref<2x128xf32, #tpu.memory_space<vmem>>, vector<2x128xf32>
      tpu.vector_store %arg2[%c0_11, %c0_12], %15 {strides = array<i32>} : memref<2x128xf32, #tpu.memory_space<vmem>>, vector<2x128xf32>,
    } else {
    }
    %c0 = arith.constant 0 : index
    %c0_1 = arith.constant 0 : index
    %3 = vector.load %arg1[%c0, %c0_1] : memref<32x128xf32, #tpu.memory_space<vmem>>, vector<32x128xf32>
    %c0_2 = arith.constant 0 : index
    %c0_3 = arith.constant 0 : index
    %4 = vector.load %arg2[%c0_2, %c0_3] : memref<2x128xf32, #tpu.memory_space<vmem>>, vector<1x128xf32>
    %cst = arith.constant dense<0.000000e+00> : vector<128xf32>
    %5 = vector.multi_reduction <add>, %3, %cst [0] : vector<32x128xf32> to vector<128xf32>
    %6 = vector.shape_cast %5 : vector<128xf32> to vector<1x128xf32>
    %7 = arith.addf %4, %6 : vector<1x128xf32>
    %c0_4 = arith.constant 0 : index
    %c0_5 = arith.constant 0 : index
    %8 = vector.load %arg2[%c0_4, %c0_5] : memref<2x128xf32, #tpu.memory_space<vmem>>, vector<1x128xf32>
    tpu.vector_store %arg2[%c0_4, %c0_5], %7 {strides = array<i32>} : memref<2x128xf32, #tpu.memory_space<vmem>>, vector<1x128xf32>,
    %c1 = arith.constant 1 : index
    %c0_6 = arith.constant 0 : index
    %9 = vector.load %arg2[%c1, %c0_6] : memref<2x128xf32, #tpu.memory_space<vmem>>, vector<1x128xf32>
    %10 = arith.mulf %3, %3 : vector<32x128xf32>
    %cst_7 = arith.constant dense<0.000000e+00> : vector<128xf32>
    %11 = vector.multi_reduction <add>, %10, %cst_7 [0] : vector<32x128xf32> to vector<128xf32>
    %12 = vector.shape_cast %11 : vector<128xf32> to vector<1x128xf32>
    %13 = arith.addf %9, %12 : vector<1x128xf32>
    %c1_8 = arith.constant 1 : index
    %c0_9 = arith.constant 0 : index
    %14 = vector.load %arg2[%c1_8, %c0_9] : memref<2x128xf32, #tpu.memory_space<vmem>>, vector<1x128xf32>
    tpu.vector_store %arg2[%c1_8, %c0_9], %13 {strides = array<i32>} : memref<2x128xf32, #tpu.memory_space<vmem>>, vector<1x128xf32>,
    return
  }
  func.func @transform_0(%arg0: i32) -> (i32, i32) {
    %c0_i32 = arith.constant 0 : i32
    %c0_i32_0 = arith.constant 0 : i32
    return %arg0, %c0_i32 : i32, i32
  }
  func.func @transform_1(%arg0: i32) -> (i32, i32) {
    %c0_i32 = arith.constant 0 : i32
    %c0_i32_0 = arith.constant 0 : i32
    %c0_i32_1 = arith.constant 0 : i32
    return %c0_i32, %c0_i32_0 : i32, i32
  }
}

</mosaic_0001>

<llo_original>
// kernel: tpu_custom_call.1
$region0: #{tpu_custom_call.1}
  #allocation0 [shape = 'u32[]', space=smem, size = 0x4, offset = 0x4, fixed_abs, tag = 'smem constant byte address 0x4 - core index']
  #allocation1 [shape = 'u32[144,128]{1,0:T(1,128)}', space=vmem, size = 0x12000, scoped, tag = 'internal scratch']
  %s0 = inlined_call_operand.hbm [shape: f32[32,128], index: 0, kind: input, shape index: {}]
  %s1 = inlined_call_operand.hbm [shape: f32[2,128], index: 1, kind: output, shape index: {}]
  %s2 = sld [smem:[#allocation0]]
  $region22: #{tpu_custom_call.1} parent=0
    _
  %s4 = ssub.s32 1, %s2
  %s5 = scalar_select 0, %s4, %s2
  $region1: #{tpu_custom_call.1} parent=0
    #allocation2 [shape = 'u8[16384]{0}', space=vmem, size = 0x4000, scoped, tag = 'input window, operand 0, single buffered']
    #allocation3 [shape = 's32[1]{0}', space=sflag, size = 0x4, scoped, tag = 'scoped memory for tpu_custom_call.1']
    #allocation4 [shape = 's32[1]{0}', space=sflag, size = 0x4, scoped, tag = 'scoped memory for tpu_custom_call.1']
    #allocation5 [shape = 'u8[1024]{0}', space=vmem, size = 0x400, scoped, tag = 'output window, operand 0, single buffered']
    %6 = vsyncpa [#allocation3], 0
    %7 = vsyncpa [#allocation4], 0
    // Predicated region
    $region2: #{tpu_custom_call.1} parent=1 // pred_check
      _
    $region3: #{tpu_custom_call.1} parent=1 // pred_check_branch
      %9 = sbr.rel (0) target = $region5
    $region4: #{tpu_custom_call.1} parent=1 // pred_region
      %s11 = ssub.s32 512, 512
      %12 = vsyncadd [#allocation3], %s11
      %s13 = sshll.u32 [#allocation2], 4
      %s14 = int_to_ptr.vmem [resolvable:$true] %s13
      %19 = dma.hbm_to_vmem [thread:$0]  %s0, 512, %s14, [#allocation3], 128, 128, 8
    $region5: #{tpu_custom_call.1} parent=1 // pred_fallthru
      _
    // Predicated region
    $region6: #{tpu_custom_call.1} parent=1 // pred_check
      _
    $region7: #{tpu_custom_call.1} parent=1 // pred_check_branch
      %21 = sbr.rel (0) target = $region9
    $region8: #{tpu_custom_call.1} parent=1 // pred_region
      %22 = dma.done [#allocation3], 512
    $region9: #{tpu_custom_call.1} parent=1 // pred_fallthru
      _
    %p23 = scmp.eq.s32.totalorder 0, 0
    // Predicated region
    $region10: #{tpu_custom_call.1} parent=1 // pred_check
      %p24 = pneg %p23
    $region11: #{tpu_custom_call.1} parent=1 // pred_check_branch
      %26 = sbr.rel (%p24) target = $region13
    $region12: #{tpu_custom_call.1} parent=1 // pred_region
      %27 = vst [vmem:[#allocation5] sm:$0x3] 0.0
    $region13: #{tpu_custom_call.1} parent=1 // pred_fallthru
      _
    %v28 = vld [vmem:[#allocation2] sm:$0xff]
    %v29 = vld [vmem:[#allocation2 + $0x8] sm:$0xff]
    %v30 = vld [vmem:[#allocation2 + $0x10] sm:$0xff]
    %v31 = vld [vmem:[#allocation2 + $0x18] sm:$0xff]
    %v32 = vld [vmem:[#allocation5] sm:$0x1]
    %v33 = vadd.f32 %v28, %v29
    %v34 = vadd.f32 %v33, %v30
    %v35 = vadd.f32 %v34, %v31
    %v36 = vrot.slane %v35, 4
    %v37 = vadd.f32 %v35, %v36
    %v38 = vrot.slane %v37, 2
    %v39 = vadd.f32 %v37, %v38
    %v40 = vrot.slane %v39, 1
    %v41 = vadd.f32 %v39, %v40
    %v42 = vadd.f32 %v32, %v41
    %43 = vst [vmem:[#allocation5] sm:$0x1] %v42
    %v44 = vld [vmem:[#allocation5 + $0x1] sm:$0x1]
    %v45 = vmul.f32 %v28, %v28
    %v46 = vmul.f32 %v29, %v29
    %v47 = vmul.f32 %v30, %v30
    %v48 = vmul.f32 %v31, %v31
    %v49 = vadd.f32 %v45, %v46
    %v50 = vadd.f32 %v49, %v47
    %v51 = vadd.f32 %v50, %v48
    %v52 = vrot.slane %v51, 4
    %v53 = vadd.f32 %v51, %v52
    %v54 = vrot.slane %v53, 2
    %v55 = vadd.f32 %v53, %v54
    %v56 = vrot.slane %v55, 1
    %v57 = vadd.f32 %v55, %v56
    %v58 = vadd.f32 %v44, %v57
    %59 = vst [vmem:[#allocation5 + $0x1] sm:$0x1] %v58
    // Predicated region
    $region14: #{tpu_custom_call.1} parent=1 // pred_check
      _
    $region15: #{tpu_custom_call.1} parent=1 // pred_check_branch
      %61 = sbr.rel (0) target = $region17
    $region16: #{tpu_custom_call.1} parent=1 // pred_region
      %s63 = ssub.s32 32, 32
      %64 = vsyncadd [#allocation4], %s63
      %s66 = sshll.u32 [#allocation5], 4
      %s67 = int_to_ptr.vmem [resolvable:$true] %s66
      %69 = dma.vmem_to_hbm [thread:$0]  %s67, 32, %s1, [#allocation4]
    $region17: #{tpu_custom_call.1} parent=1 // pred_fallthru
      _
    // Predicated region
    $region18: #{tpu_custom_call.1} parent=1 // pred_check
      _
    $region19: #{tpu_custom_call.1} parent=1 // pred_check_branch
      %71 = sbr.rel (0) target = $region21
    $region20: #{tpu_custom_call.1} parent=1 // pred_region
      %72 = dma.done [#allocation4], 32
    $region21: #{tpu_custom_call.1} parent=1 // pred_fallthru
      _
    %73 = vsyncpa [#allocation3], 1
    %74 = vsyncpa [#allocation4], 1

</llo_original>
